<compile_context>
chip_gen: v7x
topology: tpu7x:2x2x1
jax: 0.10.0
libtpu: 0.0.40
codegen_flags: <defaults>
</compile_context>

<pallas_src>
import functools

import numpy as np
import jax
import jax.numpy as jnp
from jax.experimental import pallas as pl
from jax.experimental.pallas import tpu as pltpu

N_BINS = 10
# torch.linspace(0, 1, n_bins + 1) float32 boundaries (reference only).
_BIN_BOUNDARIES = np.linspace(0.0, 1.0, N_BINS + 1, dtype=np.float32)
_BIN_LOWERS = np.asarray(_BIN_BOUNDARIES[:-1], dtype=np.float32)
_BIN_UPPERS = np.asarray(_BIN_BOUNDARIES[1:], dtype=np.float32)


def _ece_bin_kernel(logits_ref, labels_ref, out_ref, *,
                    actual_n, tile_n, tiles_per_core):
    """Accumulates per-bin (count, correct_sum, conf_sum) partials per core."""
    num_classes, tn = logits_ref.shape          # (C, tile_n) block, lane-dense
    core = pl.program_id(0)
    t = pl.program_id(1)

    @pl.when(t == 0)
    def _init():
        out_ref[...] = jnp.zeros_like(out_ref)

    logits = logits_ref[...].astype(jnp.float32)          # cast in-kernel (bf16 ok)
    labels = labels_ref[...]                               # (1, tile_n) int32

    # Per-sample (per-lane) softmax confidence without materializing probs:
    # conf = max softmax prob = 1 / sum(exp(x - colmax)).
    colmax = jnp.max(logits, axis=0, keepdims=True)                     # (1, tn)
    denom = jnp.sum(jnp.exp(logits - colmax), axis=0, keepdims=True)    # (1, tn)
    conf = 1.0 / denom                                                  # exact divide

    # prediction = first argmax (matches torch.max / jnp.argmax tie-break).
    row_iota = jax.lax.broadcasted_iota(jnp.int32, (num_classes, tn), 0)
    pred = jnp.min(jnp.where(logits == colmax, row_iota, num_classes),
                   axis=0, keepdims=True)                               # (1, tn)

    # Valid-sample mask: ragged last block and clamped padding tiles are masked
    # here instead of padding the HBM arrays in the wrapper.
    i_block = core * tiles_per_core + t
    lane = jax.lax.broadcasted_iota(jnp.int32, (1, tn), 1)
    valid = (i_block * tile_n + lane) < actual_n                        # (1, tn) bool
    valid_f = valid.astype(jnp.float32)

    conf_m = jnp.where(valid, conf, 0.0)                  # sanitize (no 0*NaN later)
    correct_m = (pred == labels).astype(jnp.float32) * valid_f

    # Single-compare binning: lo < conf <= up  <=>  ceil(conf*10) - 1 == bin.
    bin_idx = jnp.clip(
        jnp.ceil(conf_m * jnp.float32(N_BINS)).astype(jnp.int32) - 1,
        0, N_BINS - 1)                                                  # (1, tn)
    bins_iota = jax.lax.broadcasted_iota(jnp.int32, (N_BINS, tn), 0)
    onehot = (bins_iota == bin_idx).astype(jnp.float32)                 # (10, tn)

    # Offload the three per-bin reductions over tile_n to the idle MXU:
    # [valid, correct, conf] (3, tn) . onehot (10, tn)^T -> (3, 10).
    stack = jnp.concatenate([valid_f, correct_m, conf_m], axis=0)       # (3, tn)
    partial = jax.lax.dot_general(
        stack, onehot,
        dimension_numbers=(((1,), (1,)), ((), ())),
        preferred_element_type=jnp.float32)                             # (3, 10)

    out_ref[...] += partial.reshape(out_ref.shape)


def evaluate_ece(logits, labels, tile_n=None, n_cores=2):
    """logits: (N, C) float (any float dtype), labels: (N,) int -> (1,) f32 ECE."""
    n, c = logits.shape

    if tile_n is None:
        # ~1 MiB of f32 logits per block after the in-kernel cast.
        tile_n = (1 << 20) // (4 * c)
    if n < 128:
        tile_n = n                                   # single block == full lane dim
    else:
        tile_n = max(128, (min(tile_n, pl.cdiv(n, 128) * 128) // 128) * 128)

    n_blocks = pl.cdiv(n, tile_n)
    ncores = n_cores if n_blocks >= n_cores else 1
    tiles_per_core = pl.cdiv(n_blocks, ncores)

    # Lane-dense layouts: samples on the lane (last) axis.
    logits_t = jnp.transpose(logits)                 # (C, N)
    labels2d = labels.astype(jnp.int32).reshape(1, n)

    # Clamp logical tile index so padding tiles (from the per-core split) never
    # address a fully out-of-bounds block; their rows fail the valid mask anyway.
    def in_map(ci, ti):
        return (0, jnp.minimum(ci * tiles_per_core + ti, n_blocks - 1))

    kernel = functools.partial(_ece_bin_kernel, actual_n=n, tile_n=tile_n,
                               tiles_per_core=tiles_per_core)
    partials = pl.pallas_call(
        kernel,
        out_shape=jax.ShapeDtypeStruct((ncores, 3, N_BINS), jnp.float32),
        grid=(ncores, tiles_per_core),
        in_specs=[
            pl.BlockSpec((c, tile_n), in_map),       # logits tile, lanes = samples
            pl.BlockSpec((1, tile_n), in_map),       # labels tile, lane-dense
        ],
        out_specs=pl.BlockSpec((1, 3, N_BINS), lambda ci, ti: (ci, 0, 0)),
        compiler_params=pltpu.CompilerParams(
            dimension_semantics=("parallel", "arbitrary"),
            vmem_limit_bytes=32 * 1024 * 1024,       # safe on v5e/v6e/v7x
        ),
    )(logits_t, labels2d)

    # Tiny finalize (10 bins) in plain JAX: exact divides, count/n proportion.
    totals = jnp.sum(partials, axis=0)               # (3, N_BINS)
    count, accsum, confsum = totals[0], totals[1], totals[2]
    safe = jnp.maximum(count, 1.0)
    acc_in_bin = accsum / safe
    conf_in_bin = confsum / safe
    prop_in_bin = count / jnp.float32(n)
    ece = jnp.sum(jnp.where(count > 0.0,
                            jnp.abs(conf_in_bin - acc_in_bin) * prop_in_bin,
                            0.0))
    return ece.reshape(1)


def _ece_reference(logits, labels):
    """Pure-JAX replica of the PyTorch forward for sanity checking."""
    probs = jax.nn.softmax(logits.astype(jnp.float32), axis=1)
    conf = jnp.max(probs, axis=1)
    pred = jnp.argmax(probs, axis=1)
    acc = (pred == labels).astype(jnp.float32)
    n = conf.shape[0]
    ece = jnp.zeros((1,), jnp.float32)
    for lo, up in zip(_BIN_LOWERS, _BIN_UPPERS):
        in_bin = jnp.logical_and(conf > lo, conf <= up).astype(jnp.float32)
        count = jnp.sum(in_bin)
        prop = count / n
        safe = jnp.maximum(count, 1.0)
        a = jnp.sum(acc * in_bin) / safe
        c = jnp.sum(conf * in_bin) / safe
        ece = ece + jnp.where(count > 0, jnp.abs(c - a) * prop, 0.0)
    return ece


if __name__ == "__main__":
    key = jax.random.PRNGKey(0)
    k1, k2, k3, k4, k5, k6 = jax.random.split(key, 6)

    # Case 1: tiny single block (N < 128), f32.
    logits1 = jax.random.normal(k1, (64, 16), dtype=jnp.float32) * 2.0
    labels1 = jax.random.randint(k2, (64,), 0, 16, dtype=jnp.int32)
    ece1 = evaluate_ece(logits1, labels1)
    jax.block_until_ready(ece1)
    ref1 = _ece_reference(logits1, labels1)
    assert jnp.allclose(ece1, ref1, atol=1e-4, rtol=1e-4), (ece1, ref1)

    # Case 2: bf16 logits, ragged block (N=200 -> one 256-wide lane block).
    logits2 = (jax.random.normal(k3, (200, 16), dtype=jnp.float32) * 2.0
               ).astype(jnp.bfloat16)
    labels2 = jax.random.randint(k4, (200,), 0, 16, dtype=jnp.int32)
    ece2 = evaluate_ece(logits2, labels2)
    jax.block_until_ready(ece2)
    ref2 = _ece_reference(logits2.astype(jnp.float32), labels2)
    assert jnp.allclose(ece2, ref2, atol=1e-4, rtol=1e-4), (ece2, ref2)

    # Case 3: multi-block streaming + 2-core split + ragged last block + clamped
    # padding tile (600 samples, 128-wide tiles -> 5 real blocks over 2 cores).
    logits3 = jax.random.normal(k5, (600, 16), dtype=jnp.float32) * 3.0
    labels3 = jax.random.randint(k6, (600,), 0, 16, dtype=jnp.int32)
    ece3 = evaluate_ece(logits3, labels3, tile_n=128)
    jax.block_until_ready(ece3)
    ref3 = _ece_reference(logits3, labels3)
    assert jnp.allclose(ece3, ref3, atol=1e-4, rtol=1e-4), (ece3, ref3)

    print("KERNEL_OK")
</pallas_src>

<mosaic_0001>
module attributes {stable_mosaic.version = 11 : i64} {
  func.func @_ece_bin_kernel(%arg0: i32, %arg1: i32, %arg2: memref<16x64xf32, #tpu.memory_space<vmem>>, %arg3: memref<1x64xi32, #tpu.memory_space<vmem>>, %arg4: memref<1x3x10xf32, #tpu.memory_space<vmem>>) attributes {dimension_semantics = [#tpu.dimension_semantics<parallel>, #tpu.dimension_semantics<arbitrary>], iteration_bounds = array<i64: 1, 1>, scalar_prefetch = 0 : i64, scratch_operands = 0 : i64, tpu.core_type = #tpu.core_type<tc>, window_params = [{transform_indices = @transform_0, window_bounds = array<i64: 16, 64>}, {transform_indices = @transform_1, window_bounds = array<i64: 1, 64>}, {transform_indices = @transform_2, window_bounds = array<i64: 1, 3, 10>}]} {
    %c0_i32 = arith.constant 0 : i32
    %0 = arith.cmpi eq, %arg1, %c0_i32 : i32
    %1 = arith.extui %0 : i1 to i32
    %c0_i32_0 = arith.constant 0 : i32
    %2 = arith.cmpi ne, %1, %c0_i32_0 : i32
    scf.if %2 {
      %cst_19 = arith.constant 0.000000e+00 : f32
      %58 = vector.broadcast %cst_19 : f32 to vector<1x3x10xf32>
      %c0_20 = arith.constant 0 : index
      %c0_21 = arith.constant 0 : index
      %c0_22 = arith.constant 0 : index
      %59 = vector.load %arg4[%c0_20, %c0_21, %c0_22] : memref<1x3x10xf32, #tpu.memory_space<vmem>>, vector<1x3x10xf32>
      tpu.vector_store %arg4[%c0_20, %c0_21, %c0_22], %58 {strides = array<i32>} : memref<1x3x10xf32, #tpu.memory_space<vmem>>, vector<1x3x10xf32>,
    } else {
    }
    %c0 = arith.constant 0 : index
    %c0_1 = arith.constant 0 : index
    %3 = vector.load %arg2[%c0, %c0_1] : memref<16x64xf32, #tpu.memory_space<vmem>>, vector<16x64xf32>
    %c0_2 = arith.constant 0 : index
    %c0_3 = arith.constant 0 : index
    %4 = vector.load %arg3[%c0_2, %c0_3] : memref<1x64xi32, #tpu.memory_space<vmem>>, vector<1x64xi32>
    %cst = arith.constant dense<0xFF800000> : vector<64xf32>
    %5 = vector.multi_reduction <maximumf>, %3, %cst [0] : vector<16x64xf32> to vector<64xf32>
    %6 = vector.shape_cast %5 : vector<64xf32> to vector<1x64xf32>
    %7 = vector.broadcast %6 : vector<1x64xf32> to vector<16x64xf32>
    %8 = arith.subf %3, %7 : vector<16x64xf32>
    %9 = math.exp %8 : vector<16x64xf32>
    %cst_4 = arith.constant dense<0.000000e+00> : vector<64xf32>
    %10 = vector.multi_reduction <add>, %9, %cst_4 [0] : vector<16x64xf32> to vector<64xf32>
    %11 = vector.shape_cast %10 : vector<64xf32> to vector<1x64xf32>
    %cst_5 = arith.constant 1.000000e+00 : f32
    %12 = vector.broadcast %cst_5 : f32 to vector<1x64xf32>
    %13 = arith.divf %12, %11 : vector<1x64xf32>
    %14 = tpu.iota {dimensions = array<i32: 0>} : vector<16x64xi32>
    %15 = vector.broadcast %6 : vector<1x64xf32> to vector<16x64xf32>
    %16 = arith.cmpf oeq, %3, %15 : vector<16x64xf32>
    %c16_i32 = arith.constant 16 : i32
    %17 = vector.broadcast %c16_i32 : i32 to vector<16x64xi32>
    %18 = arith.select %16, %14, %17 : vector<16x64xi1>, vector<16x64xi32>
    %cst_6 = arith.constant dense<2147483647> : vector<64xi32>
    %19 = vector.multi_reduction <minsi>, %18, %cst_6 [0] : vector<16x64xi32> to vector<64xi32>
    %20 = vector.shape_cast %19 : vector<64xi32> to vector<1x64xi32>
    %c1_i32 = arith.constant 1 : i32
    %21 = arith.muli %arg0, %c1_i32 : i32
    %22 = arith.addi %21, %arg1 : i32
    %23 = tpu.iota {dimensions = array<i32: 1>} : vector<1x64xi32>
    %c64_i32 = arith.constant 64 : i32
    %24 = arith.muli %22, %c64_i32 : i32
    %25 = vector.broadcast %24 : i32 to vector<1x64xi32>
    %26 = arith.addi %25, %23 : vector<1x64xi32>
    %c64_i32_7 = arith.constant 64 : i32
    %27 = vector.broadcast %c64_i32_7 : i32 to vector<1x64xi32>
    %28 = arith.cmpi slt, %26, %27 : vector<1x64xi32>
    %29 = arith.extui %28 : vector<1x64xi1> to vector<1x64xi32>
    %30 = arith.sitofp %29 : vector<1x64xi32> to vector<1x64xf32>
    %cst_8 = arith.constant 0.000000e+00 : f32
    %31 = vector.broadcast %cst_8 : f32 to vector<1x64xf32>
    %32 = arith.select %28, %13, %31 : vector<1x64xi1>, vector<1x64xf32>
    %33 = arith.cmpi eq, %20, %4 : vector<1x64xi32>
    %34 = arith.extui %33 : vector<1x64xi1> to vector<1x64xi32>
    %35 = arith.sitofp %34 : vector<1x64xi32> to vector<1x64xf32>
    %36 = arith.mulf %35, %30 : vector<1x64xf32>
    %cst_9 = arith.constant 1.000000e+01 : f32
    %37 = vector.broadcast %cst_9 : f32 to vector<1x64xf32>
    %38 = arith.mulf %32, %37 : vector<1x64xf32>
    %39 = math.ceil %38 : vector<1x64xf32>
    %40 = arith.fptosi %39 : vector<1x64xf32> to vector<1x64xi32>
    %c1_i32_10 = arith.constant 1 : i32
    %41 = vector.broadcast %c1_i32_10 : i32 to vector<1x64xi32>
    %42 = arith.subi %40, %41 : vector<1x64xi32>
    %c0_i32_11 = arith.constant 0 : i32
    %c9_i32 = arith.constant 9 : i32
    %43 = vector.broadcast %c0_i32_11 : i32 to vector<1x64xi32>
    %44 = arith.maxsi %43, %42 : vector<1x64xi32>
    %45 = vector.broadcast %c9_i32 : i32 to vector<1x64xi32>
    %46 = arith.minsi %45, %44 : vector<1x64xi32>
    %47 = tpu.iota {dimensions = array<i32: 0>} : vector<10x64xi32>
    %48 = vector.broadcast %46 : vector<1x64xi32> to vector<10x64xi32>
    %49 = arith.cmpi eq, %47, %48 : vector<10x64xi32>
    %50 = arith.extui %49 : vector<10x64xi1> to vector<10x64xi32>
    %51 = arith.sitofp %50 : vector<10x64xi32> to vector<10x64xf32>
    %52 = tpu.concatenate %30, %36, %32 in 0 : vector<1x64xf32>, vector<1x64xf32>, vector<1x64xf32> -> vector<3x64xf32>
    %cst_12 = arith.constant dense<0.000000e+00> : vector<3x10xf32>
    %53 = tpu.matmul %52, %51, %cst_12 {dimension_numbers = #tpu.dot_dimension_numbers<[1], [1], [0], [0], [0, 0, 1, 0], [], []>} : vector<3x64xf32>, vector<10x64xf32>, vector<3x10xf32> -> vector<3x10xf32>
    %c0_13 = arith.constant 0 : index
    %c0_14 = arith.constant 0 : index
    %c0_15 = arith.constant 0 : index
    %54 = vector.load %arg4[%c0_13, %c0_14, %c0_15] : memref<1x3x10xf32, #tpu.memory_space<vmem>>, vector<1x3x10xf32>
    %55 = vector.shape_cast %53 : vector<3x10xf32> to vector<1x3x10xf32>
    %56 = arith.addf %54, %55 : vector<1x3x10xf32>
    %c0_16 = arith.constant 0 : index
    %c0_17 = arith.constant 0 : index
    %c0_18 = arith.constant 0 : index
    %57 = vector.load %arg4[%c0_16, %c0_17, %c0_18] : memref<1x3x10xf32, #tpu.memory_space<vmem>>, vector<1x3x10xf32>
    tpu.vector_store %arg4[%c0_16, %c0_17, %c0_18], %56 {strides = array<i32>} : memref<1x3x10xf32, #tpu.memory_space<vmem>>, vector<1x3x10xf32>,
    return
  }
  func.func @transform_0(%arg0: i32, %arg1: i32) -> (i32, i32) {
    %c1_i32 = arith.constant 1 : i32
    %0 = arith.muli %arg0, %c1_i32 : i32
    %1 = arith.addi %0, %arg1 : i32
    %c0_i32 = arith.constant 0 : i32
    %2 = arith.minsi %1, %c0_i32 : i32
    %c0_i32_0 = arith.constant 0 : i32
    %c0_i32_1 = arith.constant 0 : i32
    return %c0_i32_0, %2 : i32, i32
  }
  func.func @transform_1(%arg0: i32, %arg1: i32) -> (i32, i32) {
    %c1_i32 = arith.constant 1 : i32
    %0 = arith.muli %arg0, %c1_i32 : i32
    %1 = arith.addi %0, %arg1 : i32
    %c0_i32 = arith.constant 0 : i32
    %2 = arith.minsi %1, %c0_i32 : i32
    %c0_i32_0 = arith.constant 0 : i32
    %c0_i32_1 = arith.constant 0 : i32
    return %c0_i32_0, %2 : i32, i32
  }
  func.func @transform_2(%arg0: i32, %arg1: i32) -> (i32, i32, i32) {
    %c0_i32 = arith.constant 0 : i32
    %c0_i32_0 = arith.constant 0 : i32
    %c0_i32_1 = arith.constant 0 : i32
    return %arg0, %c0_i32, %c0_i32_0 : i32, i32, i32
  }
}

</mosaic_0001>

<llo_original>
// kernel: tpu_custom_call.1
$region0: #{tpu_custom_call.1}
  #allocation0 [shape = 'u32[]', space=smem, size = 0x4, offset = 0x4, fixed_abs, tag = 'smem constant byte address 0x4 - core index']
  #allocation1 [shape = 'u32[144,128]{1,0:T(1,128)}', space=vmem, size = 0x12000, scoped, tag = 'internal scratch']
  %s0 = inlined_call_operand.hbm [shape: f32[16,64], index: 0, kind: input, shape index: {}]
  %s1 = inlined_call_operand.vmem [shape: s32[1,64], index: 1, kind: input, shape index: {}]
  %s2 = inlined_call_operand.vmem [shape: f32[1,3,10], index: 2, kind: output, shape index: {}]
  %s3 = sld [smem:[#allocation0]]
  $region26: #{tpu_custom_call.1} parent=0
    _
  %s5 = ssub.s32 1, %s3
  %s6 = scalar_select 0, %s5, %s3
  $region1: #{tpu_custom_call.1} parent=0
    #allocation2 [shape = 'u8[8192]{0}', space=vmem, size = 0x2000, scoped, tag = 'input window, operand 0, single buffered']
    #allocation3 [shape = 's32[1]{0}', space=sflag, size = 0x4, scoped, tag = 'scoped memory for tpu_custom_call.1']
    %7 = vsyncpa [#allocation3], 0
    // Predicated region
    $region2: #{tpu_custom_call.1} parent=1 // pred_check
      _
    $region3: #{tpu_custom_call.1} parent=1 // pred_check_branch
      %9 = sbr.rel (0) target = $region5
    $region4: #{tpu_custom_call.1} parent=1 // pred_region
      %s10 = sadd.s32 0, 0
      %p11 = scmp.lt.s32.totalorder %s10, 0
      %s12 = scalar_select %p11, %s10, 0
      %s14 = ssub.s32 256, 256
      %15 = vsyncadd [#allocation3], %s14
      %s16 = smul.addr %s12, 128
      %s17 = scalar_lea.hbm %s0, %s16
      %s18 = sshll.u32 [#allocation2], 4
      %s19 = int_to_ptr.vmem [resolvable:$true] %s18
      %24 = dma.hbm_to_vmem [thread:$0]  %s17, 256, %s19, [#allocation3], 128, 128, 8
    $region5: #{tpu_custom_call.1} parent=1 // pred_fallthru
      _
    // Predicated region
    $region6: #{tpu_custom_call.1} parent=1 // pred_check
      _
    $region7: #{tpu_custom_call.1} parent=1 // pred_check_branch
      %26 = sbr.rel (0) target = $region9
    $region8: #{tpu_custom_call.1} parent=1 // pred_region
      %s27 = sadd.s32 0, 0
      %p28 = scmp.lt.s32.totalorder %s27, 0
      %s29 = scalar_select %p28, %s27, 0
      %p30 = scmp.lt.s32.totalorder %s29, 0
      %s31 = scalar_select %p30, %s29, 0
      %s32 = scalar_lea.vmem %s1, %s31
      %s33 = sadd.s32 0, 0
      %p34 = scmp.lt.s32.totalorder %s33, 0
      %s35 = scalar_select %p34, %s33, 0
    $region9: #{tpu_custom_call.1} parent=1 // pred_fallthru
      _
    // Predicated region
    $region10: #{tpu_custom_call.1} parent=1 // pred_check
      _
    $region11: #{tpu_custom_call.1} parent=1 // pred_check_branch
      %37 = sbr.rel (0) target = $region13
    $region12: #{tpu_custom_call.1} parent=1 // pred_region
      %38 = dma.done [#allocation3], 256
    $region13: #{tpu_custom_call.1} parent=1 // pred_fallthru
      _
    %s39 = sadd.s32 0, 0
    %p40 = scmp.lt.s32.totalorder %s39, 0
    %s41 = scalar_select %p40, %s39, 0
    %p42 = scmp.lt.s32.totalorder %s41, 0
    %s43 = scalar_select %p42, %s41, 0
    %s44 = scalar_lea.vmem %s1, %s43
    %s45 = sadd.s32 0, 0
    %p46 = scmp.lt.s32.totalorder %s45, 0
    %s47 = scalar_select %p46, %s45, 0
    %s48 = sadd.s32 0, 0
    %p49 = scmp.lt.s32.totalorder %s48, 0
    %s50 = scalar_select %p49, %s48, 0
    %p51 = scmp.lt.s32.totalorder %s50, 0
    %s52 = scalar_select %p51, %s50, 0
    %s53 = scalar_lea.vmem %s1, %s52
    %s54 = sadd.s32 0, 0
    %p55 = scmp.lt.s32.totalorder %s54, 0
    %s56 = scalar_select %p55, %s54, 0
    %p57 = scmp.eq.s32.totalorder 0, 0
    // Predicated region
    $region14: #{tpu_custom_call.1} parent=1 // pred_check
      %p58 = pneg %p57
    $region15: #{tpu_custom_call.1} parent=1 // pred_check_branch
      %60 = sbr.rel (%p58) target = $region17
    $region16: #{tpu_custom_call.1} parent=1 // pred_region
      %vm61 = vcmask 75776
      %62 = vst.msk [vmem:[%s2] sm:$0x7] %vm61, 0.0
    $region17: #{tpu_custom_call.1} parent=1 // pred_fallthru
      _
    %v63 = vld [vmem:[#allocation2] sm:$0xff]
    %v64 = vld [vmem:[#allocation2 + $0x8] sm:$0xff]
    %v65 = vld [vmem:[%s53] sm:$0x1]
    %vm66 = vcmask 523264
    %v67 = vsel %vm66, %v63, -inf
    %v68 = vsel %vm66, %v64, -inf
    %v69 = vmax.f32 %v67, %v68
    %v70 = vrot.slane %v69, 4
    %v71 = vmax.f32 %v69, %v70
    %v72 = vrot.slane %v71, 2
    %v73 = vmax.f32 %v71, %v72
    %v74 = vrot.slane %v73, 1
    %v75 = vmax.f32 %v73, %v74
    %v76 = vsub.f32 %v63, %v75
    %v77 = vsub.f32 %v64, %v75
    %v78 = vmul.f32 %v76, 1.442695
    %v79 = vpow.pop %v78
    %v80 = vmul.f32 %v77, 1.442695
    %v81 = vpow.pop %v80
    %v82 = vsel %vm66, %v79, 0.0
    %v83 = vsel %vm66, %v81, 0.0
    %v84 = vadd.f32 %v82, %v83
    %v85 = vrot.slane %v84, 4
    %v86 = vadd.f32 %v84, %v85
    %v87 = vrot.slane %v86, 2
    %v88 = vadd.f32 %v86, %v87
    %v89 = vrot.slane %v88, 1
    %v90 = vadd.f32 %v88, %v89
    %v91 = vrcp.pop %v90
    %v92 = vmul.f32 1.0, %v91
    %v93 = vlaneseq
    %v94 = vshrl.u32 %v93, 7
    %v95 = vadd.s32 %v94, 8
    %vm96 = vcmp.eq.f32.partialorder %v63, %v75
    %vm97 = vcmp.eq.f32.partialorder %v64, %v75
    %v98 = vsel %vm96, %v94, 16
    %v99 = vsel %vm97, %v95, 16
    %v100 = vsel %vm66, %v98, 2147483647
    %v101 = vsel %vm66, %v99, 2147483647
    %vm102 = vcmp.lt.s32.totalorder %v100, %v101
    %v103 = vsel %vm102, %v100, %v101
    %v104 = vrot.slane %v103, 4
    %vm105 = vcmp.lt.s32.totalorder %v103, %v104
    %v106 = vsel %vm105, %v103, %v104
    %v107 = vrot.slane %v106, 2
    %vm108 = vcmp.lt.s32.totalorder %v106, %v107
    %v109 = vsel %vm108, %v106, %v107
    %v110 = vrot.slane %v109, 1
    %vm111 = vcmp.lt.s32.totalorder %v109, %v110
    %v112 = vsel %vm111, %v109, %v110
    %s113 = sadd.s32 0, 0
    %v114 = vlaneseq
    %v115 = vand.u32 %v114, 127
    %s116 = smul.u32 %s113, 64
    %v117 = vstv %s116
    %v118 = vadd.s32 %v117, %v115
    %vm119 = vcmp.lt.s32.totalorder %v118, 64
    %v120 = vsel %vm119, 1, 0
    %v121 = vcvt.s32.f32 %v120
    %v122 = vsel %vm119, %v92, 0.0
    %vm123 = vcmp.eq.s32.totalorder %v112, %v65
    %v124 = vsel %vm123, 1, 0
    %v125 = vcvt.s32.f32 %v124
    %v126 = vmul.f32 %v125, %v121
    %v127 = vmul.f32 %v122, 10.0
    %v128 = vceil.f32 %v127
    %v129 = vcvt.f32.s32.to.zero.pseudo %v128
    %v130 = vsub.s32 %v129, 1
    %vm131 = vcmp.gt.s32.totalorder %v130, 0
    %v132 = vsel %vm131, %v130, 0
    %vm133 = vcmp.lt.s32.totalorder %v132, 9
    %v134 = vsel %vm133, %v132, 9
    %vm135 = vcmp.eq.s32.totalorder %v94, %v134
    %vm136 = vcmp.eq.s32.totalorder %v95, %v134
    %v137 = vsel %vm135, 1, 0
    %v138 = vsel %vm136, 1, 0
    %v139 = vcvt.s32.f32 %v137
    %v140 = vcvt.s32.f32 %v138
    %v142 = vrot.slane %v126, 7
    %vm144 = vcmask 1040384
    %v145 = vsel %vm144, %v121, %v142
    %vm146 = vcmask 1041408
    %v147 = vsel %vm146, %v145, %v122
    %v149 = vsel %vm66, %v147, 0
    %v152 = vsel %vm66, %v139, 0
    %v155 = vsel %vm66, %v140, 0
    %157 = vmatprep.subr.mxu0 0.0
    %158 = vmatpush1.xpose.msra.mxu0 %v152
    %159 = vmatprep.subr.mxu0 0.0
    %160 = vmatpush1.xpose.msra.mxu0 %v155
    %161 = vmatprep.subr.mxu0 0.0
    %162 = vmatpush1.xpose.msra.mxu0 0.0
    %163 = vmatprep.subr.mxu0 0.0
    %164 = vmatpush1.xpose.msra.mxu0 0.0
    %165 = vmatprep.subr.mxu0 0.0
    %166 = vmatpush1.xpose.msra.mxu0 0.0
    %167 = vmatprep.subr.mxu0 0.0
    %168 = vmatpush1.xpose.msra.mxu0 0.0
    %169 = vmatprep.subr.mxu0 0.0
    %170 = vmatpush1.xpose.msra.mxu0 0.0
    %171 = vmatprep.subr.mxu0 0.0
    %172 = vmatpush1.xpose.msra.mxu0 0.0
    %173 = vmatprep.subr.mxu0 0.0
    %174 = vmatpush1.xpose.msra.mxu0 0.0
    %175 = vmatprep.subr.mxu0 0.0
    %176 = vmatpush1.xpose.msra.mxu0 0.0
    %177 = vmatprep.subr.mxu0 0.0
    %178 = vmatpush1.xpose.msra.mxu0 0.0
    %179 = vmatprep.subr.mxu0 0.0
    %180 = vmatpush1.xpose.msra.mxu0 0.0
    %181 = vmatprep.subr.mxu0 0.0
    %182 = vmatpush1.xpose.msra.mxu0 0.0
    %183 = vmatprep.subr.mxu0 0.0
    %184 = vmatpush1.xpose.msra.mxu0 0.0
    %185 = vmatprep.subr.mxu0 0.0
    %186 = vmatpush1.xpose.msra.mxu0 0.0
    %187 = vmatprep.subr.mxu0 0.0
    %188 = vmatpush1.xpose.msra.mxu0 0.0
    %189 = vmatprep.subr.mxu0 0.0
    %190 = vmatpush1.xpose.msra.mxu0 0.0
    %191 = vmatprep.subr.mxu0 0.0
    %192 = vmatpush1.xpose.msra.mxu0 0.0
    %193 = vmatprep.subr.mxu0 0.0
    %194 = vmatpush1.xpose.msra.mxu0 0.0
    %195 = vmatprep.subr.mxu0 0.0
    %196 = vmatpush1.xpose.msra.mxu0 0.0
    %197 = vmatprep.subr.mxu0 0.0
    %198 = vmatpush1.xpose.msra.mxu0 0.0
    %199 = vmatprep.subr.mxu0 0.0
    %200 = vmatpush1.xpose.msra.mxu0 0.0
    %201 = vmatprep.subr.mxu0 0.0
    %202 = vmatpush1.xpose.msra.mxu0 0.0
    %203 = vmatprep.subr.mxu0 0.0
    %204 = vmatpush1.xpose.msra.mxu0 0.0
    %205 = vmatprep.subr.mxu0 0.0
    %206 = vmatpush1.xpose.msra.mxu0 0.0
    %207 = vmatprep.subr.mxu0 0.0
    %208 = vmatpush1.xpose.msra.mxu0 0.0
    %209 = vmatprep.subr.mxu0 0.0
    %210 = vmatpush1.xpose.msra.mxu0 0.0
    %211 = vmatprep.subr.mxu0 0.0
    %212 = vmatpush1.xpose.msra.mxu0 0.0
    %213 = vmatprep.subr.mxu0 0.0
    %214 = vmatpush1.xpose.msra.mxu0 0.0
    %215 = vmatprep.subr.mxu0 0.0
    %216 = vmatpush1.xpose.msra.mxu0 0.0
    %217 = vmatprep.subr.mxu0 0.0
    %218 = vmatpush1.xpose.msra.mxu0 0.0
    %219 = vmatprep.subr.mxu0 0.0
    %220 = vmatpush1.xpose.msra.mxu0 0.0
    %221 = vmatprep.mubr.f32.mxu0 0.0
    %222 = vmatmul.mubr.f32.gmra.mrb[0].mxu0 %v149
    %v223 = vpop.f32.mrb[0].mxu0
    %v224 = vadd.f32 0.0, %v223
    %v225 = vpop.f32.mrb[0].mxu0
    %226 = vdwg.mxu0
    %v227 = vld [vmem:[%s2] sm:$0x7]
    %v228 = vadd.f32 %v227, %v224
    %vm229 = vcmask 75776
    %230 = vst.msk [vmem:[%s2] sm:$0x7] %vm229, %v228
    // Predicated region
    $region18: #{tpu_custom_call.1} parent=1 // pred_check
      _
    $region19: #{tpu_custom_call.1} parent=1 // pred_check_branch
      %232 = sbr.rel (0) target = $region21
    $region20: #{tpu_custom_call.1} parent=1 // pred_region
      _
    $region21: #{tpu_custom_call.1} parent=1 // pred_fallthru
      _
    // Predicated region
    $region22: #{tpu_custom_call.1} parent=1 // pred_check
      _
    $region23: #{tpu_custom_call.1} parent=1 // pred_check_branch
      %234 = sbr.rel (0) target = $region25
    $region24: #{tpu_custom_call.1} parent=1 // pred_region
      _
    $region25: #{tpu_custom_call.1} parent=1 // pred_fallthru
      _
    %235 = vsyncpa [#allocation3], 1

</llo_original>
